<compile_context>
chip_gen: v6e
topology: v6e:2x2x1
jax: 0.10.0
libtpu: 0.0.40
codegen_flags: <defaults>
</compile_context>

<pallas_src>
import functools
import math

import jax
import jax.numpy as jnp
from jax import lax
from jax.experimental import pallas as pl
from jax.experimental.pallas import tpu as pltpu


def _round_up(x, m):
    return (x + m - 1) // m * m


def _make_gaussian_tile_kernel(precision):
    def kernel(inv_sig_sq_ref, xr_ref, xc_ref, sqr_ref, sqc_ref, o_ref, acc_ref):
        """One (TM, TN) output tile, accumulated over the K (feature) grid axis.

        inv_sig_sq_ref : (1, 1) f32 in SMEM, holds 1 / sigma^2  (== -2 * scale)
        xr_ref         : (TM, TK) f32 row block of X
        xc_ref         : (TN, TK) f32 column block of X
        sqr_ref        : (TM, 1) f32, already scaled:  -||x_i||^2 / (2 sigma^2)
        sqc_ref        : (1, TN) f32, already scaled:  -||x_j||^2 / (2 sigma^2)
        o_ref          : (TM, TN) output tile
        acc_ref        : (TM, TN) f32 VMEM accumulator for the cross term
        """
        k = pl.program_id(2)

        @pl.when(k == 0)
        def _():
            acc_ref[...] = jnp.zeros_like(acc_ref)

        # Cross term on the MXU: g[a, b] += xr_a . xc_b (contract over features).
        acc_ref[...] += lax.dot_general(
            xr_ref[...],
            xc_ref[...],
            dimension_numbers=(((1,), (1,)), ((), ())),
            precision=precision,
            preferred_element_type=jnp.float32,
        )

        @pl.when(k == pl.num_programs(2) - 1)
        def _():
            # t = -||xi - xj||^2 / (2 sigma^2); clamp at 0 (Gram-form cancellation
            # can make it slightly positive for near-identical points).
            t = sqr_ref[...] + sqc_ref[...] + acc_ref[...] * inv_sig_sq_ref[0, 0]
            o_ref[...] = jnp.exp(jnp.minimum(t, 0.0)).astype(o_ref.dtype)

    return kernel


def gaussian_kernel(x, sigma=None, track_running_stats=True, alpha=1.0,
                    tile_m=512, tile_n=256, tile_k=512,
                    out_dtype=jnp.float32,
                    precision=lax.Precision.HIGHEST):
    """JAX/Pallas equivalent of GaussianKernel.forward for 2-D X of shape (N, D)."""
    assert track_running_stats or sigma is not None
    assert x.ndim == 2

    n, d = x.shape
    xf = x.astype(jnp.float32)  # single dtype-policy cast

    # Self squared norms: reused for (a) closed-form sigma^2, (b) the kernel tiles.
    sq = jnp.sum(xf * xf, axis=1)  # (N,)

    if track_running_stats:
        # Exact: mean_{i,j}||xi-xj||^2 = 2*mean_i||xi||^2 - 2*||mean_i xi||^2.
        mu = jnp.mean(xf, axis=0)
        sig_sq = jnp.float32(alpha) * (2.0 * jnp.mean(sq) - 2.0 * jnp.sum(mu * mu))
    else:
        sig_sq = jnp.asarray(sigma, jnp.float32) ** 2
    # NOTE: no epsilon floor, matching the PyTorch module (sigma^2 == 0 -> NaN there too).
    scale = (-0.5 / sig_sq).astype(jnp.float32)                     # negative scalar
    inv_sig_sq = jnp.reshape(1.0 / sig_sq, (1, 1)).astype(jnp.float32)  # == -2*scale

    # ---- Tile-size selection: clamp to the aligned problem size, keep (8,128). ----
    tile_m = _round_up(min(tile_m, _round_up(n, 8)), 8)
    tile_n = _round_up(min(tile_n, _round_up(n, 128)), 128)

    # Independent row/col padding (no lcm inflation).
    n_pad_m = _round_up(n, tile_m)
    n_pad_n = _round_up(n, tile_n)

    # Feature (K) axis: one full-D block when it fits, else 128-aligned K-blocking.
    if d > tile_k:
        tile_k = _round_up(tile_k, 128)
        d_pad = _round_up(d, tile_k)
    else:
        tile_k = d
        d_pad = d

    pad_m, pad_n, pad_d = n_pad_m - n, n_pad_n - n, d_pad - d

    x_rows = jnp.pad(xf, ((0, pad_m), (0, pad_d))) if (pad_m or pad_d) else xf
    x_cols = jnp.pad(xf, ((0, pad_n), (0, pad_d))) if (pad_n or pad_d) else xf

    # Pre-scaled self norms (O(N) wrapper work, saves VALU ops per output element).
    sq_scaled = sq * scale
    sq_row = (jnp.pad(sq_scaled, (0, pad_m)) if pad_m else sq_scaled)[:, None]  # (Npm, 1)
    sq_col = (jnp.pad(sq_scaled, (0, pad_n)) if pad_n else sq_scaled)[None, :]  # (1, Npn)

    grid = (n_pad_m // tile_m, n_pad_n // tile_n, d_pad // tile_k)

    out = pl.pallas_call(
        _make_gaussian_tile_kernel(precision),
        out_shape=jax.ShapeDtypeStruct((n_pad_m, n_pad_n), out_dtype),
        grid_spec=pltpu.PrefetchScalarGridSpec(
            num_scalar_prefetch=0,
            grid=grid,
            in_specs=[
                pl.BlockSpec(memory_space=pltpu.MemorySpace.SMEM),      # 1/sigma^2 (1,1)
                pl.BlockSpec((tile_m, tile_k), lambda i, j, k: (i, k)),  # X row block
                pl.BlockSpec((tile_n, tile_k), lambda i, j, k: (j, k)),  # X col block
                pl.BlockSpec((tile_m, 1), lambda i, j, k: (i, 0)),       # scaled row norms
                pl.BlockSpec((1, tile_n), lambda i, j, k: (0, j)),       # scaled col norms
            ],
            out_specs=pl.BlockSpec((tile_m, tile_n), lambda i, j, k: (i, j)),
            scratch_shapes=[pltpu.VMEM((tile_m, tile_n), jnp.float32)],
        ),
        compiler_params=pltpu.CompilerParams(
            dimension_semantics=("parallel", "parallel", "arbitrary"),
        ),
    )(inv_sig_sq, x_rows, x_cols, sq_row, sq_col)

    if pad_m or pad_n:
        out = out[:n, :n]
    return out


def _reference(x, sigma=None, track_running_stats=True, alpha=1.0):
    # Mirrors the PyTorch forward exactly (broadcast diff + in-batch mean).
    diff = x[None, :, :] - x[:, None, :]
    l2 = jnp.sum(diff * diff, axis=2)
    if track_running_stats:
        sig_sq = alpha * jnp.mean(l2)
    else:
        sig_sq = sigma * sigma
    return jnp.exp(-l2 / (2.0 * sig_sq))


if __name__ == "__main__":
    key = jax.random.PRNGKey(0)

    # Default module configuration: sigma=None, track_running_stats=True, alpha=1.0.
    N, D = 8, 32
    x = jax.random.normal(key, (N, D), dtype=jnp.float32)
    out_track = gaussian_kernel(x, sigma=None, track_running_stats=True, alpha=1.0)
    jax.block_until_ready(out_track)
    ref_track = _reference(x, track_running_stats=True, alpha=1.0)
    assert out_track.shape == (N, N)
    assert jnp.allclose(out_track, ref_track, atol=1e-4, rtol=1e-4)

    # Fixed-sigma configuration (track_running_stats=False).
    out_fixed = gaussian_kernel(x, sigma=2.0, track_running_stats=False, alpha=1.0)
    jax.block_until_ready(out_fixed)
    ref_fixed = _reference(x, sigma=2.0, track_running_stats=False)
    assert jnp.allclose(out_fixed, ref_fixed, atol=1e-4, rtol=1e-4)

    # Multi-tile path: N not a multiple of the tile sizes -> independent padding.
    N2, D2 = 300, 64
    x2 = jax.random.normal(jax.random.PRNGKey(0), (N2, D2), dtype=jnp.float32)
    out2 = gaussian_kernel(x2, sigma=None, track_running_stats=True, alpha=0.5)
    jax.block_until_ready(out2)
    ref2 = _reference(x2, track_running_stats=True, alpha=0.5)
    assert out2.shape == (N2, N2)
    assert jnp.allclose(out2, ref2, atol=1e-4, rtol=1e-4)

    # K-blocked path (D split across the "arbitrary" grid axis + accumulator),
    # exercised with small tiles so the test stays tiny.
    N3, D3 = 160, 256
    x3 = jax.random.normal(jax.random.PRNGKey(0), (N3, D3), dtype=jnp.float32)
    out3 = gaussian_kernel(x3, sigma=1.5, track_running_stats=False,
                           tile_m=64, tile_n=128, tile_k=128)
    jax.block_until_ready(out3)
    ref3 = _reference(x3, sigma=1.5, track_running_stats=False)
    assert out3.shape == (N3, N3)
    assert jnp.allclose(out3, ref3, atol=1e-4, rtol=1e-4)

    print("KERNEL_OK")
</pallas_src>

<mosaic_0001>
module attributes {stable_mosaic.version = 11 : i64} {
  func.func @kernel(%arg0: i32, %arg1: i32, %arg2: i32, %arg3: memref<1x1xf32, #tpu.memory_space<smem>>, %arg4: memref<8x32xf32, #tpu.memory_space<vmem>>, %arg5: memref<128x32xf32, #tpu.memory_space<vmem>>, %arg6: memref<8x1xf32, #tpu.memory_space<vmem>>, %arg7: memref<1x128xf32, #tpu.memory_space<vmem>>, %arg8: memref<8x128xf32, #tpu.memory_space<vmem>>, %arg9: memref<8x128xf32, #tpu.memory_space<vmem>>) attributes {dimension_semantics = [#tpu.dimension_semantics<parallel>, #tpu.dimension_semantics<parallel>, #tpu.dimension_semantics<arbitrary>], iteration_bounds = array<i64: 1, 1, 1>, scalar_prefetch = 0 : i64, scratch_operands = 1 : i64, tpu.core_type = #tpu.core_type<tc>, window_params = [{transform_indices = @transform_0, window_bounds = array<i64: 1, 1>}, {transform_indices = @transform_1, window_bounds = array<i64: 8, 32>}, {transform_indices = @transform_2, window_bounds = array<i64: 128, 32>}, {transform_indices = @transform_3, window_bounds = array<i64: 8, 1>}, {transform_indices = @transform_4, window_bounds = array<i64: 1, 128>}, {transform_indices = @transform_5, window_bounds = array<i64: 8, 128>}]} {
    %c0_i32 = arith.constant 0 : i32
    %0 = arith.cmpi eq, %arg2, %c0_i32 : i32
    %1 = arith.extui %0 : i1 to i32
    %c0_i32_0 = arith.constant 0 : i32
    %2 = arith.cmpi ne, %1, %c0_i32_0 : i32
    scf.if %2 {
      %cst_10 = arith.constant 0.000000e+00 : f32
      %12 = vector.broadcast %cst_10 : f32 to vector<8x128xf32>
      %c0_11 = arith.constant 0 : index
      %c0_12 = arith.constant 0 : index
      %13 = vector.load %arg9[%c0_11, %c0_12] : memref<8x128xf32, #tpu.memory_space<vmem>>, vector<8x128xf32>
      tpu.vector_store %arg9[%c0_11, %c0_12], %12 {strides = array<i32>} : memref<8x128xf32, #tpu.memory_space<vmem>>, vector<8x128xf32>,
    } else {
    }
    %c0 = arith.constant 0 : index
    %c0_1 = arith.constant 0 : index
    %3 = vector.load %arg9[%c0, %c0_1] : memref<8x128xf32, #tpu.memory_space<vmem>>, vector<8x128xf32>
    %c0_2 = arith.constant 0 : index
    %c0_3 = arith.constant 0 : index
    %4 = vector.load %arg4[%c0_2, %c0_3] : memref<8x32xf32, #tpu.memory_space<vmem>>, vector<8x32xf32>
    %c0_4 = arith.constant 0 : index
    %c0_5 = arith.constant 0 : index
    %5 = vector.load %arg5[%c0_4, %c0_5] : memref<128x32xf32, #tpu.memory_space<vmem>>, vector<128x32xf32>
    %cst = arith.constant dense<0.000000e+00> : vector<8x128xf32>
    %6 = tpu.matmul %4, %5, %cst {dimension_numbers = #tpu.dot_dimension_numbers<[1], [1], [0], [0], [0, 0, 1, 0], [], []>, precision = #tpu.contract_precision<fp32>} : vector<8x32xf32>, vector<128x32xf32>, vector<8x128xf32> -> vector<8x128xf32>
    %7 = arith.addf %3, %6 : vector<8x128xf32>
    %c0_6 = arith.constant 0 : index
    %c0_7 = arith.constant 0 : index
    %8 = vector.load %arg9[%c0_6, %c0_7] : memref<8x128xf32, #tpu.memory_space<vmem>>, vector<8x128xf32>
    tpu.vector_store %arg9[%c0_6, %c0_7], %7 {strides = array<i32>} : memref<8x128xf32, #tpu.memory_space<vmem>>, vector<8x128xf32>,
    %c0_i32_8 = arith.constant 0 : i32
    %9 = arith.cmpi eq, %arg2, %c0_i32_8 : i32
    %10 = arith.extui %9 : i1 to i32
    %c0_i32_9 = arith.constant 0 : i32
    %11 = arith.cmpi ne, %10, %c0_i32_9 : i32
    scf.if %11 {
      %c0_10 = arith.constant 0 : index
      %c0_11 = arith.constant 0 : index
      %12 = vector.load %arg6[%c0_10, %c0_11] : memref<8x1xf32, #tpu.memory_space<vmem>>, vector<8x1xf32>
      %c0_12 = arith.constant 0 : index
      %c0_13 = arith.constant 0 : index
      %13 = vector.load %arg7[%c0_12, %c0_13] : memref<1x128xf32, #tpu.memory_space<vmem>>, vector<1x128xf32>
      %14 = vector.broadcast %12 : vector<8x1xf32> to vector<8x128xf32>
      %15 = vector.broadcast %13 : vector<1x128xf32> to vector<8x128xf32>
      %16 = arith.addf %14, %15 : vector<8x128xf32>
      %c0_14 = arith.constant 0 : index
      %c0_15 = arith.constant 0 : index
      %17 = vector.load %arg9[%c0_14, %c0_15] : memref<8x128xf32, #tpu.memory_space<vmem>>, vector<8x128xf32>
      %c0_16 = arith.constant 0 : index
      %c0_17 = arith.constant 0 : index
      %18 = memref.load %arg3[%c0_16, %c0_17] : memref<1x1xf32, #tpu.memory_space<smem>>
      %19 = vector.broadcast %18 : f32 to vector<8x128xf32>
      %20 = arith.mulf %17, %19 : vector<8x128xf32>
      %21 = arith.addf %16, %20 : vector<8x128xf32>
      %cst_18 = arith.constant 0.000000e+00 : f32
      %22 = vector.broadcast %cst_18 : f32 to vector<8x128xf32>
      %23 = arith.minimumf %21, %22 : vector<8x128xf32>
      %24 = math.exp %23 : vector<8x128xf32>
      %c0_19 = arith.constant 0 : index
      %c0_20 = arith.constant 0 : index
      %25 = vector.load %arg8[%c0_19, %c0_20] : memref<8x128xf32, #tpu.memory_space<vmem>>, vector<8x128xf32>
      tpu.vector_store %arg8[%c0_19, %c0_20], %24 {strides = array<i32>} : memref<8x128xf32, #tpu.memory_space<vmem>>, vector<8x128xf32>,
    } else {
    }
    return
  }
  func.func @transform_0(%arg0: i32, %arg1: i32, %arg2: i32) -> (i32, i32) {
    %c0_i32 = arith.constant 0 : i32
    %c0_i32_0 = arith.constant 0 : i32
    %c0_i32_1 = arith.constant 0 : i32
    return %c0_i32, %c0_i32_0 : i32, i32
  }
  func.func @transform_1(%arg0: i32, %arg1: i32, %arg2: i32) -> (i32, i32) {
    %c0_i32 = arith.constant 0 : i32
    return %arg0, %arg2 : i32, i32
  }
  func.func @transform_2(%arg0: i32, %arg1: i32, %arg2: i32) -> (i32, i32) {
    %c0_i32 = arith.constant 0 : i32
    return %arg1, %arg2 : i32, i32
  }
  func.func @transform_3(%arg0: i32, %arg1: i32, %arg2: i32) -> (i32, i32) {
    %c0_i32 = arith.constant 0 : i32
    %c0_i32_0 = arith.constant 0 : i32
    return %arg0, %c0_i32 : i32, i32
  }
  func.func @transform_4(%arg0: i32, %arg1: i32, %arg2: i32) -> (i32, i32) {
    %c0_i32 = arith.constant 0 : i32
    %c0_i32_0 = arith.constant 0 : i32
    return %c0_i32, %arg1 : i32, i32
  }
  func.func @transform_5(%arg0: i32, %arg1: i32, %arg2: i32) -> (i32, i32) {
    %c0_i32 = arith.constant 0 : i32
    return %arg0, %arg1 : i32, i32
  }
}

</mosaic_0001>

<llo_original>
// kernel: tpu_custom_call.1
$region0: #{tpu_custom_call.1}
  #allocation0 [shape = 'u32[]', space=smem, size = 0x4, offset = 0x4, fixed_abs, tag = 'smem constant byte address 0x4 - core index']
  #allocation1 [shape = 'u32[144,128]{1,0:T(1,128)}', space=vmem, size = 0x12000, scoped, tag = 'internal scratch']
  #allocation2 [shape = 'f32[8,128]{1,0:T(8,128)}', space=vmem, size = 0x1000, scoped, tag = 'scratch operand']
  #allocation3 [shape = 'f32[1,1]{1,0:T(1,128)S(6)}', space=smem, size = 0x200, scoped, tag = 'scoped memory for tpu_custom_call.1']
  %s0 = inlined_call_operand.<no memory space> [shape: f32[1,1], index: 0, kind: input, shape index: {}]
  %s1 = inlined_call_operand.vmem [shape: f32[8,32], index: 1, kind: input, shape index: {}]
  %s2 = inlined_call_operand.vmem [shape: f32[128,32], index: 2, kind: input, shape index: {}]
  %s3 = inlined_call_operand.vmem [shape: f32[8,1], index: 3, kind: input, shape index: {}]
  %s4 = inlined_call_operand.vmem [shape: f32[1,128], index: 4, kind: input, shape index: {}]
  %s5 = inlined_call_operand.hbm [shape: f32[8,128], index: 5, kind: output, shape index: {}]
  %s6 = sld [smem:[#allocation0]]
  $region38: #{tpu_custom_call.1} parent=0
    _
  %s8 = ssub.s32 1, %s6
  %s9 = scalar_select 0, %s8, %s6
  %10 = sst [smem:[#allocation3]] %s0
  $region1: #{tpu_custom_call.1} parent=0
    #allocation4 [shape = 'u8[4096]{0}', space=vmem, size = 0x1000, scoped, tag = 'output window, operand 0, single buffered']
    #allocation5 [shape = 's32[1]{0}', space=sflag, size = 0x4, scoped, tag = 'scoped memory for tpu_custom_call.1']
    %11 = vsyncpa [#allocation5], 0
    // Predicated region
    $region2: #{tpu_custom_call.1} parent=1 // pred_check
      _
    $region3: #{tpu_custom_call.1} parent=1 // pred_check_branch
      %13 = sbr.rel (0) target = $region5
    $region4: #{tpu_custom_call.1} parent=1 // pred_region
      _
    $region5: #{tpu_custom_call.1} parent=1 // pred_fallthru
      _
    // Predicated region
    $region6: #{tpu_custom_call.1} parent=1 // pred_check
      _
    $region7: #{tpu_custom_call.1} parent=1 // pred_check_branch
      %15 = sbr.rel (0) target = $region9
    $region8: #{tpu_custom_call.1} parent=1 // pred_region
      _
    $region9: #{tpu_custom_call.1} parent=1 // pred_fallthru
      _
    // Predicated region
    $region10: #{tpu_custom_call.1} parent=1 // pred_check
      _
    $region11: #{tpu_custom_call.1} parent=1 // pred_check_branch
      %17 = sbr.rel (0) target = $region13
    $region12: #{tpu_custom_call.1} parent=1 // pred_region
      _
    $region13: #{tpu_custom_call.1} parent=1 // pred_fallthru
      _
    // Predicated region
    $region14: #{tpu_custom_call.1} parent=1 // pred_check
      _
    $region15: #{tpu_custom_call.1} parent=1 // pred_check_branch
      %19 = sbr.rel (0) target = $region17
    $region16: #{tpu_custom_call.1} parent=1 // pred_region
      _
    $region17: #{tpu_custom_call.1} parent=1 // pred_fallthru
      _
    // Predicated region
    $region18: #{tpu_custom_call.1} parent=1 // pred_check
      _
    $region19: #{tpu_custom_call.1} parent=1 // pred_check_branch
      %21 = sbr.rel (0) target = $region21
    $region20: #{tpu_custom_call.1} parent=1 // pred_region
      _
    $region21: #{tpu_custom_call.1} parent=1 // pred_fallthru
      _
    %p22 = scmp.eq.s32.totalorder 0, 0
    // Predicated region
    $region22: #{tpu_custom_call.1} parent=1 // pred_check
      %p23 = pneg %p22
    $region23: #{tpu_custom_call.1} parent=1 // pred_check_branch
      %25 = sbr.rel (%p23) target = $region25
    $region24: #{tpu_custom_call.1} parent=1 // pred_region
      %26 = vst [vmem:[#allocation2] sm:$0xff] 0.0
    $region25: #{tpu_custom_call.1} parent=1 // pred_fallthru
      _
    %v27 = vld [vmem:[#allocation2] sm:$0xff]
    %v28 = vld [vmem:[%s1] sm:$0xff]
    %v29 = vld [vmem:[%s2] sm:$0xff]
    %v30 = vld [vmem:[%s2 + $0x8] sm:$0xff]
    %v31 = vld [vmem:[%s2 + $0x10] sm:$0xff]
    %v32 = vld [vmem:[%s2 + $0x18] sm:$0xff]
    %v33 = vld [vmem:[%s2 + $0x20] sm:$0xff]
    %v34 = vld [vmem:[%s2 + $0x28] sm:$0xff]
    %v35 = vld [vmem:[%s2 + $0x30] sm:$0xff]
    %v36 = vld [vmem:[%s2 + $0x38] sm:$0xff]
    %v37 = vld [vmem:[%s2 + $0x40] sm:$0xff]
    %v38 = vld [vmem:[%s2 + $0x48] sm:$0xff]
    %v39 = vld [vmem:[%s2 + $0x50] sm:$0xff]
    %v40 = vld [vmem:[%s2 + $0x58] sm:$0xff]
    %v41 = vld [vmem:[%s2 + $0x60] sm:$0xff]
    %v42 = vld [vmem:[%s2 + $0x68] sm:$0xff]
    %v43 = vld [vmem:[%s2 + $0x70] sm:$0xff]
    %v44 = vld [vmem:[%s2 + $0x78] sm:$0xff]
    %vm45 = vcmask 261120
    %v47 = vsel %vm45, %v28, 0
    %v50 = vsel %vm45, %v29, 0
    %v53 = vsel %vm45, %v30, 0
    %v56 = vsel %vm45, %v31, 0
    %v59 = vsel %vm45, %v32, 0
    %v62 = vsel %vm45, %v33, 0
    %v65 = vsel %vm45, %v34, 0
    %v68 = vsel %vm45, %v35, 0
    %v71 = vsel %vm45, %v36, 0
    %v74 = vsel %vm45, %v37, 0
    %v77 = vsel %vm45, %v38, 0
    %v80 = vsel %vm45, %v39, 0
    %v83 = vsel %vm45, %v40, 0
    %v86 = vsel %vm45, %v41, 0
    %v89 = vsel %vm45, %v42, 0
    %v92 = vsel %vm45, %v43, 0
    %v95 = vsel %vm45, %v44, 0
    %97 = vmatprep.subr.mxu0 0.0
    %v98 = vand.u32 %v95, 4294901760
    %99 = vmatpush1.xpose.msra.mxu0 %v98
    %100 = vmatprep.subr.mxu0 0.0
    %v101 = vand.u32 %v92, 4294901760
    %102 = vmatpush1.xpose.msra.mxu0 %v101
    %103 = vmatprep.subr.mxu0 0.0
    %v104 = vand.u32 %v89, 4294901760
    %105 = vmatpush1.xpose.msra.mxu0 %v104
    %106 = vmatprep.subr.mxu0 0.0
    %v107 = vand.u32 %v86, 4294901760
    %108 = vmatpush1.xpose.msra.mxu0 %v107
    %109 = vmatprep.subr.mxu0 0.0
    %v110 = vand.u32 %v83, 4294901760
    %111 = vmatpush1.xpose.msra.mxu0 %v110
    %112 = vmatprep.subr.mxu0 0.0
    %v113 = vand.u32 %v80, 4294901760
    %114 = vmatpush1.xpose.msra.mxu0 %v113
    %115 = vmatprep.subr.mxu0 0.0
    %v116 = vand.u32 %v77, 4294901760
    %117 = vmatpush1.xpose.msra.mxu0 %v116
    %118 = vmatprep.subr.mxu0 0.0
    %v119 = vand.u32 %v74, 4294901760
    %120 = vmatpush1.xpose.msra.mxu0 %v119
    %121 = vmatprep.subr.mxu0 0.0
    %v122 = vand.u32 %v71, 4294901760
    %123 = vmatpush1.xpose.msra.mxu0 %v122
    %124 = vmatprep.subr.mxu0 0.0
    %v125 = vand.u32 %v68, 4294901760
    %126 = vmatpush1.xpose.msra.mxu0 %v125
    %127 = vmatprep.subr.mxu0 0.0
    %v128 = vand.u32 %v65, 4294901760
    %129 = vmatpush1.xpose.msra.mxu0 %v128
    %130 = vmatprep.subr.mxu0 0.0
    %v131 = vand.u32 %v62, 4294901760
    %132 = vmatpush1.xpose.msra.mxu0 %v131
    %133 = vmatprep.subr.mxu0 0.0
    %v134 = vand.u32 %v59, 4294901760
    %135 = vmatpush1.xpose.msra.mxu0 %v134
    %136 = vmatprep.subr.mxu0 0.0
    %v137 = vand.u32 %v56, 4294901760
    %138 = vmatpush1.xpose.msra.mxu0 %v137
    %139 = vmatprep.subr.mxu0 0.0
    %v140 = vand.u32 %v53, 4294901760
    %141 = vmatpush1.xpose.msra.mxu0 %v140
    %142 = vmatprep.subr.mxu0 0.0
    %v143 = vand.u32 %v50, 4294901760
    %144 = vmatpush1.xpose.msra.mxu0 %v143
    %145 = vmatprep.subr.mxu0 0.0
    %146 = vmatpush2.xpose.msra.mxu0 0.0
    %147 = vmatprep.subr.mxu0 0.0
    %148 = vmatpush2.xpose.msra.mxu0 0.0
    %149 = vmatprep.subr.mxu0 0.0
    %150 = vmatpush2.xpose.msra.mxu0 0.0
    %151 = vmatprep.subr.mxu0 0.0
    %152 = vmatpush2.xpose.msra.mxu0 0.0
    %153 = vmatprep.subr.mxu0 0.0
    %154 = vmatpush2.xpose.msra.mxu0 0.0
    %155 = vmatprep.subr.mxu0 0.0
    %156 = vmatpush2.xpose.msra.mxu0 0.0
    %157 = vmatprep.subr.mxu0 0.0
    %158 = vmatpush2.xpose.msra.mxu0 0.0
    %159 = vmatprep.subr.mxu0 0.0
    %160 = vmatpush2.xpose.msra.mxu0 0.0
    %161 = vmatprep.subr.mxu0 0.0
    %162 = vmatpush2.xpose.msra.mxu0 0.0
    %163 = vmatprep.subr.mxu0 0.0
    %164 = vmatpush2.xpose.msra.mxu0 0.0
    %165 = vmatprep.subr.mxu0 0.0
    %166 = vmatpush2.xpose.msra.mxu0 0.0
    %167 = vmatprep.subr.mxu0 0.0
    %168 = vmatpush2.xpose.msra.mxu0 0.0
    %169 = vmatprep.subr.mxu0 0.0
    %170 = vmatpush2.xpose.msra.mxu0 0.0
    %171 = vmatprep.subr.mxu0 0.0
    %172 = vmatpush2.xpose.msra.mxu0 0.0
    %173 = vmatprep.subr.mxu0 0.0
    %174 = vmatpush2.xpose.msra.mxu0 0.0
    %175 = vmatprep.subr.mxu0 0.0
    %176 = vmatpush2.xpose.msra.mxu0 0.0
    %177 = vmatprep.mubr.f32.mxu0 0.0
    %v178 = vand.u32 %v47, 4294901760
    %v179 = vsub.f32 %v47, %v178
    %v180 = vand.u32 %v179, 4294901760
    %v181 = vsub.f32 %v179, %v180
    %v182 = vand.u32 %v181, 4294901760
    %183 = vmatmul.mubr.f32.gmra.mxu0 %v182
    %v184 = vpop.f32.mrf.mxu0
    %v185 = vadd.f32 0.0, %v184
    %v186 = vpop.f32.mrf.mxu0
    %187 = vdwg.mxu0
    %188 = vmatprep.subr.mxu0 0.0
    %v189 = vand.u32 %v95, 4294901760
    %v190 = vsub.f32 %v95, %v189
    %v191 = vand.u32 %v190, 4294901760
    %v192 = vsub.f32 %v190, %v191
    %v193 = vand.u32 %v192, 4294901760
    %194 = vmatpush1.xpose.msra.mxu0 %v193
    %195 = vmatprep.subr.mxu0 0.0
    %v196 = vand.u32 %v92, 4294901760
    %v197 = vsub.f32 %v92, %v196
    %v198 = vand.u32 %v197, 4294901760
    %v199 = vsub.f32 %v197, %v198
    %v200 = vand.u32 %v199, 4294901760
    %201 = vmatpush1.xpose.msra.mxu0 %v200
    %202 = vmatprep.subr.mxu0 0.0
    %v203 = vand.u32 %v89, 4294901760
    %v204 = vsub.f32 %v89, %v203
    %v205 = vand.u32 %v204, 4294901760
    %v206 = vsub.f32 %v204, %v205
    %v207 = vand.u32 %v206, 4294901760
    %208 = vmatpush1.xpose.msra.mxu0 %v207
    %209 = vmatprep.subr.mxu0 0.0
    %v210 = vand.u32 %v86, 4294901760
    %v211 = vsub.f32 %v86, %v210
    %v212 = vand.u32 %v211, 4294901760
    %v213 = vsub.f32 %v211, %v212
    %v214 = vand.u32 %v213, 4294901760
    %215 = vmatpush1.xpose.msra.mxu0 %v214
    %216 = vmatprep.subr.mxu0 0.0
    %v217 = vand.u32 %v83, 4294901760
    %v218 = vsub.f32 %v83, %v217
    %v219 = vand.u32 %v218, 4294901760
    %v220 = vsub.f32 %v218, %v219
    %v221 = vand.u32 %v220, 4294901760
    %222 = vmatpush1.xpose.msra.mxu0 %v221
    %223 = vmatprep.subr.mxu0 0.0
    %v224 = vand.u32 %v80, 4294901760
    %v225 = vsub.f32 %v80, %v224
    %v226 = vand.u32 %v225, 4294901760
    %v227 = vsub.f32 %v225, %v226
    %v228 = vand.u32 %v227, 4294901760
    %229 = vmatpush1.xpose.msra.mxu0 %v228
    %230 = vmatprep.subr.mxu0 0.0
    %v231 = vand.u32 %v77, 4294901760
    %v232 = vsub.f32 %v77, %v231
    %v233 = vand.u32 %v232, 4294901760
    %v234 = vsub.f32 %v232, %v233
    %v235 = vand.u32 %v234, 4294901760
    %236 = vmatpush1.xpose.msra.mxu0 %v235
    %237 = vmatprep.subr.mxu0 0.0
    %v238 = vand.u32 %v74, 4294901760
    %v239 = vsub.f32 %v74, %v238
    %v240 = vand.u32 %v239, 4294901760
    %v241 = vsub.f32 %v239, %v240
    %v242 = vand.u32 %v241, 4294901760
    %243 = vmatpush1.xpose.msra.mxu0 %v242
    %244 = vmatprep.subr.mxu0 0.0
    %v245 = vand.u32 %v71, 4294901760
    %v246 = vsub.f32 %v71, %v245
    %v247 = vand.u32 %v246, 4294901760
    %v248 = vsub.f32 %v246, %v247
    %v249 = vand.u32 %v248, 4294901760
    %250 = vmatpush1.xpose.msra.mxu0 %v249
    %251 = vmatprep.subr.mxu0 0.0
    %v252 = vand.u32 %v68, 4294901760
    %v253 = vsub.f32 %v68, %v252
    %v254 = vand.u32 %v253, 4294901760
    %v255 = vsub.f32 %v253, %v254
    %v256 = vand.u32 %v255, 4294901760
    %257 = vmatpush1.xpose.msra.mxu0 %v256
    %258 = vmatprep.subr.mxu0 0.0
    %v259 = vand.u32 %v65, 4294901760
    %v260 = vsub.f32 %v65, %v259
    %v261 = vand.u32 %v260, 4294901760
    %v262 = vsub.f32 %v260, %v261
    %v263 = vand.u32 %v262, 4294901760
    %264 = vmatpush1.xpose.msra.mxu0 %v263
    %265 = vmatprep.subr.mxu0 0.0
    %v266 = vand.u32 %v62, 4294901760
    %v267 = vsub.f32 %v62, %v266
    %v268 = vand.u32 %v267, 4294901760
    %v269 = vsub.f32 %v267, %v268
    %v270 = vand.u32 %v269, 4294901760
    %271 = vmatpush1.xpose.msra.mxu0 %v270
    %272 = vmatprep.subr.mxu0 0.0
    %v273 = vand.u32 %v59, 4294901760
    %v274 = vsub.f32 %v59, %v273
    %v275 = vand.u32 %v274, 4294901760
    %v276 = vsub.f32 %v274, %v275
    %v277 = vand.u32 %v276, 4294901760
    %278 = vmatpush1.xpose.msra.mxu0 %v277
    %279 = vmatprep.subr.mxu0 0.0
    %v280 = vand.u32 %v56, 4294901760
    %v281 = vsub.f32 %v56, %v280
    %v282 = vand.u32 %v281, 4294901760
    %v283 = vsub.f32 %v281, %v282
    %v284 = vand.u32 %v283, 4294901760
    %285 = vmatpush1.xpose.msra.mxu0 %v284
    %286 = vmatprep.subr.mxu0 0.0
    %v287 = vand.u32 %v53, 4294901760
    %v288 = vsub.f32 %v53, %v287
    %v289 = vand.u32 %v288, 4294901760
    %v290 = vsub.f32 %v288, %v289
    %v291 = vand.u32 %v290, 4294901760
    %292 = vmatpush1.xpose.msra.mxu0 %v291
    %293 = vmatprep.subr.mxu0 0.0
    %v294 = vand.u32 %v50, 4294901760
    %v295 = vsub.f32 %v50, %v294
    %v296 = vand.u32 %v295, 4294901760
    %v297 = vsub.f32 %v295, %v296
    %v298 = vand.u32 %v297, 4294901760
    %299 = vmatpush1.xpose.msra.mxu0 %v298
    %300 = vmatprep.subr.mxu0 0.0
    %301 = vmatpush2.xpose.msra.mxu0 0.0
    %302 = vmatprep.subr.mxu0 0.0
    %303 = vmatpush2.xpose.msra.mxu0 0.0
    %304 = vmatprep.subr.mxu0 0.0
    %305 = vmatpush2.xpose.msra.mxu0 0.0
    %306 = vmatprep.subr.mxu0 0.0
    %307 = vmatpush2.xpose.msra.mxu0 0.0
    %308 = vmatprep.subr.mxu0 0.0
    %309 = vmatpush2.xpose.msra.mxu0 0.0
    %310 = vmatprep.subr.mxu0 0.0
    %311 = vmatpush2.xpose.msra.mxu0 0.0
    %312 = vmatprep.subr.mxu0 0.0
    %313 = vmatpush2.xpose.msra.mxu0 0.0
    %314 = vmatprep.subr.mxu0 0.0
    %315 = vmatpush2.xpose.msra.mxu0 0.0
    %316 = vmatprep.subr.mxu0 0.0
    %317 = vmatpush2.xpose.msra.mxu0 0.0
    %318 = vmatprep.subr.mxu0 0.0
    %319 = vmatpush2.xpose.msra.mxu0 0.0
    %320 = vmatprep.subr.mxu0 0.0
    %321 = vmatpush2.xpose.msra.mxu0 0.0
    %322 = vmatprep.subr.mxu0 0.0
    %323 = vmatpush2.xpose.msra.mxu0 0.0
    %324 = vmatprep.subr.mxu0 0.0
    %325 = vmatpush2.xpose.msra.mxu0 0.0
    %326 = vmatprep.subr.mxu0 0.0
    %327 = vmatpush2.xpose.msra.mxu0 0.0
    %328 = vmatprep.subr.mxu0 0.0
    %329 = vmatpush2.xpose.msra.mxu0 0.0
    %330 = vmatprep.subr.mxu0 0.0
    %331 = vmatpush2.xpose.msra.mxu0 0.0
    %332 = vmatprep.mubr.f32.mxu0 0.0
    %v333 = vand.u32 %v47, 4294901760
    %334 = vmatmul.mubr.f32.gmra.mxu0 %v333
    %v335 = vpop.f32.mrf.mxu0
    %v336 = vadd.f32 %v185, %v335
    %v337 = vpop.f32.mrf.mxu0
    %338 = vdwg.mxu0
    %339 = vmatprep.subr.mxu0 0.0
    %v340 = vand.u32 %v95, 4294901760
    %v341 = vsub.f32 %v95, %v340
    %342 = vmatpush1.xpose.msra.mxu0 %v341
    %343 = vmatprep.subr.mxu0 0.0
    %v344 = vand.u32 %v92, 4294901760
    %v345 = vsub.f32 %v92, %v344
    %346 = vmatpush1.xpose.msra.mxu0 %v345
    %347 = vmatprep.subr.mxu0 0.0
    %v348 = vand.u32 %v89, 4294901760
    %v349 = vsub.f32 %v89, %v348
    %350 = vmatpush1.xpose.msra.mxu0 %v349
    %351 = vmatprep.subr.mxu0 0.0
    %v352 = vand.u32 %v86, 4294901760
    %v353 = vsub.f32 %v86, %v352
    %354 = vmatpush1.xpose.msra.mxu0 %v353
    %355 = vmatprep.subr.mxu0 0.0
    %v356 = vand.u32 %v83, 4294901760
    %v357 = vsub.f32 %v83, %v356
    %358 = vmatpush1.xpose.msra.mxu0 %v357
    %359 = vmatprep.subr.mxu0 0.0
    %v360 = vand.u32 %v80, 4294901760
    %v361 = vsub.f32 %v80, %v360
    %362 = vmatpush1.xpose.msra.mxu0 %v361
    %363 = vmatprep.subr.mxu0 0.0
    %v364 = vand.u32 %v77, 4294901760
    %v365 = vsub.f32 %v77, %v364
    %366 = vmatpush1.xpose.msra.mxu0 %v365
    %367 = vmatprep.subr.mxu0 0.0
    %v368 = vand.u32 %v74, 4294901760
    %v369 = vsub.f32 %v74, %v368
    %370 = vmatpush1.xpose.msra.mxu0 %v369
    %371 = vmatprep.subr.mxu0 0.0
    %v372 = vand.u32 %v71, 4294901760
    %v373 = vsub.f32 %v71, %v372
    %374 = vmatpush1.xpose.msra.mxu0 %v373
    %375 = vmatprep.subr.mxu0 0.0
    %v376 = vand.u32 %v68, 4294901760
    %v377 = vsub.f32 %v68, %v376
    %378 = vmatpush1.xpose.msra.mxu0 %v377
    %379 = vmatprep.subr.mxu0 0.0
    %v380 = vand.u32 %v65, 4294901760
    %v381 = vsub.f32 %v65, %v380
    %382 = vmatpush1.xpose.msra.mxu0 %v381
    %383 = vmatprep.subr.mxu0 0.0
    %v384 = vand.u32 %v62, 4294901760
    %v385 = vsub.f32 %v62, %v384
    %386 = vmatpush1.xpose.msra.mxu0 %v385
    %387 = vmatprep.subr.mxu0 0.0
    %v388 = vand.u32 %v59, 4294901760
    %v389 = vsub.f32 %v59, %v388
    %390 = vmatpush1.xpose.msra.mxu0 %v389
    %391 = vmatprep.subr.mxu0 0.0
    %v392 = vand.u32 %v56, 4294901760
    %v393 = vsub.f32 %v56, %v392
    %394 = vmatpush1.xpose.msra.mxu0 %v393
    %395 = vmatprep.subr.mxu0 0.0
    %v396 = vand.u32 %v53, 4294901760
    %v397 = vsub.f32 %v53, %v396
    %398 = vmatpush1.xpose.msra.mxu0 %v397
    %399 = vmatprep.subr.mxu0 0.0
    %v400 = vand.u32 %v50, 4294901760
    %v401 = vsub.f32 %v50, %v400
    %402 = vmatpush1.xpose.msra.mxu0 %v401
    %403 = vmatprep.subr.mxu0 0.0
    %404 = vmatpush2.xpose.msra.mxu0 0.0
    %405 = vmatprep.subr.mxu0 0.0
    %406 = vmatpush2.xpose.msra.mxu0 0.0
    %407 = vmatprep.subr.mxu0 0.0
    %408 = vmatpush2.xpose.msra.mxu0 0.0
    %409 = vmatprep.subr.mxu0 0.0
    %410 = vmatpush2.xpose.msra.mxu0 0.0
    %411 = vmatprep.subr.mxu0 0.0
    %412 = vmatpush2.xpose.msra.mxu0 0.0
    %413 = vmatprep.subr.mxu0 0.0
    %414 = vmatpush2.xpose.msra.mxu0 0.0
    %415 = vmatprep.subr.mxu0 0.0
    %416 = vmatpush2.xpose.msra.mxu0 0.0
    %417 = vmatprep.subr.mxu0 0.0
    %418 = vmatpush2.xpose.msra.mxu0 0.0
    %419 = vmatprep.subr.mxu0 0.0
    %420 = vmatpush2.xpose.msra.mxu0 0.0
    %421 = vmatprep.subr.mxu0 0.0
    %422 = vmatpush2.xpose.msra.mxu0 0.0
    %423 = vmatprep.subr.mxu0 0.0
    %424 = vmatpush2.xpose.msra.mxu0 0.0
    %425 = vmatprep.subr.mxu0 0.0
    %426 = vmatpush2.xpose.msra.mxu0 0.0
    %427 = vmatprep.subr.mxu0 0.0
    %428 = vmatpush2.xpose.msra.mxu0 0.0
    %429 = vmatprep.subr.mxu0 0.0
    %430 = vmatpush2.xpose.msra.mxu0 0.0
    %431 = vmatprep.subr.mxu0 0.0
    %432 = vmatpush2.xpose.msra.mxu0 0.0
    %433 = vmatprep.subr.mxu0 0.0
    %434 = vmatpush2.xpose.msra.mxu0 0.0
    %435 = vmatprep.mubr.f32.mxu0 0.0
    %v436 = vand.u32 %v47, 4294901760
    %v437 = vsub.f32 %v47, %v436
    %438 = vmatmul.mubr.f32.gmra.mxu0 %v437
    %v439 = vpop.f32.mrf.mxu0
    %v440 = vadd.f32 %v336, %v439
    %v441 = vpop.f32.mrf.mxu0
    %442 = vdwg.mxu0
    %443 = vmatprep.subr.mxu0 0.0
    %v444 = vand.u32 %v95, 4294901760
    %445 = vmatpush1.xpose.msra.mxu0 %v444
    %446 = vmatprep.subr.mxu0 0.0
    %v447 = vand.u32 %v92, 4294901760
    %448 = vmatpush1.xpose.msra.mxu0 %v447
    %449 = vmatprep.subr.mxu0 0.0
    %v450 = vand.u32 %v89, 4294901760
    %451 = vmatpush1.xpose.msra.mxu0 %v450
    %452 = vmatprep.subr.mxu0 0.0
    %v453 = vand.u32 %v86, 4294901760
    %454 = vmatpush1.xpose.msra.mxu0 %v453
    %455 = vmatprep.subr.mxu0 0.0
    %v456 = vand.u32 %v83, 4294901760
    %457 = vmatpush1.xpose.msra.mxu0 %v456
    %458 = vmatprep.subr.mxu0 0.0
    %v459 = vand.u32 %v80, 4294901760
    %460 = vmatpush1.xpose.msra.mxu0 %v459
    %461 = vmatprep.subr.mxu0 0.0
    %v462 = vand.u32 %v77, 4294901760
    %463 = vmatpush1.xpose.msra.mxu0 %v462
    %464 = vmatprep.subr.mxu0 0.0
    %v465 = vand.u32 %v74, 4294901760
    %466 = vmatpush1.xpose.msra.mxu0 %v465
    %467 = vmatprep.subr.mxu0 0.0
    %v468 = vand.u32 %v71, 4294901760
    %469 = vmatpush1.xpose.msra.mxu0 %v468
    %470 = vmatprep.subr.mxu0 0.0
    %v471 = vand.u32 %v68, 4294901760
    %472 = vmatpush1.xpose.msra.mxu0 %v471
    %473 = vmatprep.subr.mxu0 0.0
    %v474 = vand.u32 %v65, 4294901760
    %475 = vmatpush1.xpose.msra.mxu0 %v474
    %476 = vmatprep.subr.mxu0 0.0
    %v477 = vand.u32 %v62, 4294901760
    %478 = vmatpush1.xpose.msra.mxu0 %v477
    %479 = vmatprep.subr.mxu0 0.0
    %v480 = vand.u32 %v59, 4294901760
    %481 = vmatpush1.xpose.msra.mxu0 %v480
    %482 = vmatprep.subr.mxu0 0.0
    %v483 = vand.u32 %v56, 4294901760
    %484 = vmatpush1.xpose.msra.mxu0 %v483
    %485 = vmatprep.subr.mxu0 0.0
    %v486 = vand.u32 %v53, 4294901760
    %487 = vmatpush1.xpose.msra.mxu0 %v486
    %488 = vmatprep.subr.mxu0 0.0
    %v489 = vand.u32 %v50, 4294901760
    %490 = vmatpush1.xpose.msra.mxu0 %v489
    %491 = vmatprep.subr.mxu0 0.0
    %492 = vmatpush2.xpose.msra.mxu0 0.0
    %493 = vmatprep.subr.mxu0 0.0
    %494 = vmatpush2.xpose.msra.mxu0 0.0
    %495 = vmatprep.subr.mxu0 0.0
    %496 = vmatpush2.xpose.msra.mxu0 0.0
    %497 = vmatprep.subr.mxu0 0.0
    %498 = vmatpush2.xpose.msra.mxu0 0.0
    %499 = vmatprep.subr.mxu0 0.0
    %500 = vmatpush2.xpose.msra.mxu0 0.0
    %501 = vmatprep.subr.mxu0 0.0
    %502 = vmatpush2.xpose.msra.mxu0 0.0
    %503 = vmatprep.subr.mxu0 0.0
    %504 = vmatpush2.xpose.msra.mxu0 0.0
    %505 = vmatprep.subr.mxu0 0.0
    %506 = vmatpush2.xpose.msra.mxu0 0.0
    %507 = vmatprep.subr.mxu0 0.0
    %508 = vmatpush2.xpose.msra.mxu0 0.0
    %509 = vmatprep.subr.mxu0 0.0
    %510 = vmatpush2.xpose.msra.mxu0 0.0
    %511 = vmatprep.subr.mxu0 0.0
    %512 = vmatpush2.xpose.msra.mxu0 0.0
    %513 = vmatprep.subr.mxu0 0.0
    %514 = vmatpush2.xpose.msra.mxu0 0.0
    %515 = vmatprep.subr.mxu0 0.0
    %516 = vmatpush2.xpose.msra.mxu0 0.0
    %517 = vmatprep.subr.mxu0 0.0
    %518 = vmatpush2.xpose.msra.mxu0 0.0
    %519 = vmatprep.subr.mxu0 0.0
    %520 = vmatpush2.xpose.msra.mxu0 0.0
    %521 = vmatprep.subr.mxu0 0.0
    %522 = vmatpush2.xpose.msra.mxu0 0.0
    %523 = vmatprep.mubr.f32.mxu0 0.0
    %v524 = vand.u32 %v47, 4294901760
    %v525 = vsub.f32 %v47, %v524
    %v526 = vand.u32 %v525, 4294901760
    %527 = vmatmul.mubr.f32.gmra.mxu0 %v526
    %v528 = vpop.f32.mrf.mxu0
    %v529 = vadd.f32 %v440, %v528
    %v530 = vpop.f32.mrf.mxu0
    %531 = vdwg.mxu0
    %532 = vmatprep.subr.mxu0 0.0
    %v533 = vand.u32 %v95, 4294901760
    %v534 = vsub.f32 %v95, %v533
    %v535 = vand.u32 %v534, 4294901760
    %536 = vmatpush1.xpose.msra.mxu0 %v535
    %537 = vmatprep.subr.mxu0 0.0
    %v538 = vand.u32 %v92, 4294901760
    %v539 = vsub.f32 %v92, %v538
    %v540 = vand.u32 %v539, 4294901760
    %541 = vmatpush1.xpose.msra.mxu0 %v540
    %542 = vmatprep.subr.mxu0 0.0
    %v543 = vand.u32 %v89, 4294901760
    %v544 = vsub.f32 %v89, %v543
    %v545 = vand.u32 %v544, 4294901760
    %546 = vmatpush1.xpose.msra.mxu0 %v545
    %547 = vmatprep.subr.mxu0 0.0
    %v548 = vand.u32 %v86, 4294901760
    %v549 = vsub.f32 %v86, %v548
    %v550 = vand.u32 %v549, 4294901760
    %551 = vmatpush1.xpose.msra.mxu0 %v550
    %552 = vmatprep.subr.mxu0 0.0
    %v553 = vand.u32 %v83, 4294901760
    %v554 = vsub.f32 %v83, %v553
    %v555 = vand.u32 %v554, 4294901760
    %556 = vmatpush1.xpose.msra.mxu0 %v555
    %557 = vmatprep.subr.mxu0 0.0
    %v558 = vand.u32 %v80, 4294901760
    %v559 = vsub.f32 %v80, %v558
    %v560 = vand.u32 %v559, 4294901760
    %561 = vmatpush1.xpose.msra.mxu0 %v560
    %562 = vmatprep.subr.mxu0 0.0
    %v563 = vand.u32 %v77, 4294901760
    %v564 = vsub.f32 %v77, %v563
    %v565 = vand.u32 %v564, 4294901760
    %566 = vmatpush1.xpose.msra.mxu0 %v565
    %567 = vmatprep.subr.mxu0 0.0
    %v568 = vand.u32 %v74, 4294901760
    %v569 = vsub.f32 %v74, %v568
    %v570 = vand.u32 %v569, 4294901760
    %571 = vmatpush1.xpose.msra.mxu0 %v570
    %572 = vmatprep.subr.mxu0 0.0
    %v573 = vand.u32 %v71, 4294901760
    %v574 = vsub.f32 %v71, %v573
    %v575 = vand.u32 %v574, 4294901760
    %576 = vmatpush1.xpose.msra.mxu0 %v575
    %577 = vmatprep.subr.mxu0 0.0
    %v578 = vand.u32 %v68, 4294901760
    %v579 = vsub.f32 %v68, %v578
    %v580 = vand.u32 %v579, 4294901760
    %581 = vmatpush1.xpose.msra.mxu0 %v580
    %582 = vmatprep.subr.mxu0 0.0
    %v583 = vand.u32 %v65, 4294901760
    %v584 = vsub.f32 %v65, %v583
    %v585 = vand.u32 %v584, 4294901760
    %586 = vmatpush1.xpose.msra.mxu0 %v585
    %587 = vmatprep.subr.mxu0 0.0
    %v588 = vand.u32 %v62, 4294901760
    %v589 = vsub.f32 %v62, %v588
    %v590 = vand.u32 %v589, 4294901760
    %591 = vmatpush1.xpose.msra.mxu0 %v590
    %592 = vmatprep.subr.mxu0 0.0
    %v593 = vand.u32 %v59, 4294901760
    %v594 = vsub.f32 %v59, %v593
    %v595 = vand.u32 %v594, 4294901760
    %596 = vmatpush1.xpose.msra.mxu0 %v595
    %597 = vmatprep.subr.mxu0 0.0
    %v598 = vand.u32 %v56, 4294901760
    %v599 = vsub.f32 %v56, %v598
    %v600 = vand.u32 %v599, 4294901760
    %601 = vmatpush1.xpose.msra.mxu0 %v600
    %602 = vmatprep.subr.mxu0 0.0
    %v603 = vand.u32 %v53, 4294901760
    %v604 = vsub.f32 %v53, %v603
    %v605 = vand.u32 %v604, 4294901760
    %606 = vmatpush1.xpose.msra.mxu0 %v605
    %607 = vmatprep.subr.mxu0 0.0
    %v608 = vand.u32 %v50, 4294901760
    %v609 = vsub.f32 %v50, %v608
    %v610 = vand.u32 %v609, 4294901760
    %611 = vmatpush1.xpose.msra.mxu0 %v610
    %612 = vmatprep.subr.mxu0 0.0
    %613 = vmatpush2.xpose.msra.mxu0 0.0
    %614 = vmatprep.subr.mxu0 0.0
    %615 = vmatpush2.xpose.msra.mxu0 0.0
    %616 = vmatprep.subr.mxu0 0.0
    %617 = vmatpush2.xpose.msra.mxu0 0.0
    %618 = vmatprep.subr.mxu0 0.0
    %619 = vmatpush2.xpose.msra.mxu0 0.0
    %620 = vmatprep.subr.mxu0 0.0
    %621 = vmatpush2.xpose.msra.mxu0 0.0
    %622 = vmatprep.subr.mxu0 0.0
    %623 = vmatpush2.xpose.msra.mxu0 0.0
    %624 = vmatprep.subr.mxu0 0.0
    %625 = vmatpush2.xpose.msra.mxu0 0.0
    %626 = vmatprep.subr.mxu0 0.0
    %627 = vmatpush2.xpose.msra.mxu0 0.0
    %628 = vmatprep.subr.mxu0 0.0
    %629 = vmatpush2.xpose.msra.mxu0 0.0
    %630 = vmatprep.subr.mxu0 0.0
    %631 = vmatpush2.xpose.msra.mxu0 0.0
    %632 = vmatprep.subr.mxu0 0.0
    %633 = vmatpush2.xpose.msra.mxu0 0.0
    %634 = vmatprep.subr.mxu0 0.0
    %635 = vmatpush2.xpose.msra.mxu0 0.0
    %636 = vmatprep.subr.mxu0 0.0
    %637 = vmatpush2.xpose.msra.mxu0 0.0
    %638 = vmatprep.subr.mxu0 0.0
    %639 = vmatpush2.xpose.msra.mxu0 0.0
    %640 = vmatprep.subr.mxu0 0.0
    %641 = vmatpush2.xpose.msra.mxu0 0.0
    %642 = vmatprep.subr.mxu0 0.0
    %643 = vmatpush2.xpose.msra.mxu0 0.0
    %644 = vmatprep.mubr.f32.mxu0 0.0
    %v645 = vand.u32 %v47, 4294901760
    %646 = vmatmul.mubr.f32.gmra.mxu0 %v645
    %v647 = vpop.f32.mrf.mxu0
    %v648 = vadd.f32 %v529, %v647
    %v649 = vpop.f32.mrf.mxu0
    %650 = vdwg.mxu0
    %651 = vmatprep.subr.mxu0 0.0
    %v652 = vand.u32 %v95, 4294901760
    %653 = vmatpush1.xpose.msra.mxu0 %v652
    %654 = vmatprep.subr.mxu0 0.0
    %v655 = vand.u32 %v92, 4294901760
    %656 = vmatpush1.xpose.msra.mxu0 %v655
    %657 = vmatprep.subr.mxu0 0.0
    %v658 = vand.u32 %v89, 4294901760
    %659 = vmatpush1.xpose.msra.mxu0 %v658
    %660 = vmatprep.subr.mxu0 0.0
    %v661 = vand.u32 %v86, 4294901760
    %662 = vmatpush1.xpose.msra.mxu0 %v661
    %663 = vmatprep.subr.mxu0 0.0
    %v664 = vand.u32 %v83, 4294901760
    %665 = vmatpush1.xpose.msra.mxu0 %v664
    %666 = vmatprep.subr.mxu0 0.0
    %v667 = vand.u32 %v80, 4294901760
    %668 = vmatpush1.xpose.msra.mxu0 %v667
    %669 = vmatprep.subr.mxu0 0.0
    %v670 = vand.u32 %v77, 4294901760
    %671 = vmatpush1.xpose.msra.mxu0 %v670
    %672 = vmatprep.subr.mxu0 0.0
    %v673 = vand.u32 %v74, 4294901760
    %674 = vmatpush1.xpose.msra.mxu0 %v673
    %675 = vmatprep.subr.mxu0 0.0
    %v676 = vand.u32 %v71, 4294901760
    %677 = vmatpush1.xpose.msra.mxu0 %v676
    %678 = vmatprep.subr.mxu0 0.0
    %v679 = vand.u32 %v68, 4294901760
    %680 = vmatpush1.xpose.msra.mxu0 %v679
    %681 = vmatprep.subr.mxu0 0.0
    %v682 = vand.u32 %v65, 4294901760
    %683 = vmatpush1.xpose.msra.mxu0 %v682
    %684 = vmatprep.subr.mxu0 0.0
    %v685 = vand.u32 %v62, 4294901760
    %686 = vmatpush1.xpose.msra.mxu0 %v685
    %687 = vmatprep.subr.mxu0 0.0
    %v688 = vand.u32 %v59, 4294901760
    %689 = vmatpush1.xpose.msra.mxu0 %v688
    %690 = vmatprep.subr.mxu0 0.0
    %v691 = vand.u32 %v56, 4294901760
    %692 = vmatpush1.xpose.msra.mxu0 %v691
    %693 = vmatprep.subr.mxu0 0.0
    %v694 = vand.u32 %v53, 4294901760
    %695 = vmatpush1.xpose.msra.mxu0 %v694
    %696 = vmatprep.subr.mxu0 0.0
    %v697 = vand.u32 %v50, 4294901760
    %698 = vmatpush1.xpose.msra.mxu0 %v697
    %699 = vmatprep.subr.mxu0 0.0
    %700 = vmatpush2.xpose.msra.mxu0 0.0
    %701 = vmatprep.subr.mxu0 0.0
    %702 = vmatpush2.xpose.msra.mxu0 0.0
    %703 = vmatprep.subr.mxu0 0.0
    %704 = vmatpush2.xpose.msra.mxu0 0.0
    %705 = vmatprep.subr.mxu0 0.0
    %706 = vmatpush2.xpose.msra.mxu0 0.0
    %707 = vmatprep.subr.mxu0 0.0
    %708 = vmatpush2.xpose.msra.mxu0 0.0
    %709 = vmatprep.subr.mxu0 0.0
    %710 = vmatpush2.xpose.msra.mxu0 0.0
    %711 = vmatprep.subr.mxu0 0.0
    %712 = vmatpush2.xpose.msra.mxu0 0.0
    %713 = vmatprep.subr.mxu0 0.0
    %714 = vmatpush2.xpose.msra.mxu0 0.0
    %715 = vmatprep.subr.mxu0 0.0
    %716 = vmatpush2.xpose.msra.mxu0 0.0
    %717 = vmatprep.subr.mxu0 0.0
    %718 = vmatpush2.xpose.msra.mxu0 0.0
    %719 = vmatprep.subr.mxu0 0.0
    %720 = vmatpush2.xpose.msra.mxu0 0.0
    %721 = vmatprep.subr.mxu0 0.0
    %722 = vmatpush2.xpose.msra.mxu0 0.0
    %723 = vmatprep.subr.mxu0 0.0
    %724 = vmatpush2.xpose.msra.mxu0 0.0
    %725 = vmatprep.subr.mxu0 0.0
    %726 = vmatpush2.xpose.msra.mxu0 0.0
    %727 = vmatprep.subr.mxu0 0.0
    %728 = vmatpush2.xpose.msra.mxu0 0.0
    %729 = vmatprep.subr.mxu0 0.0
    %730 = vmatpush2.xpose.msra.mxu0 0.0
    %731 = vmatprep.mubr.f32.mxu0 0.0
    %v732 = vand.u32 %v47, 4294901760
    %733 = vmatmul.mubr.f32.gmra.mxu0 %v732
    %v734 = vpop.f32.mrf.mxu0
    %v735 = vadd.f32 %v648, %v734
    %v736 = vpop.f32.mrf.mxu0
    %737 = vdwg.mxu0
    %v738 = vadd.f32 %v27, %v735
    %739 = vst [vmem:[#allocation2] sm:$0xff] %v738
    // Predicated region
    $region26: #{tpu_custom_call.1} parent=1 // pred_check
      %p740 = pneg %p22
    $region27: #{tpu_custom_call.1} parent=1 // pred_check_branch
      %742 = sbr.rel (%p740) target = $region29
    $region28: #{tpu_custom_call.1} parent=1 // pred_region
      %v743 = vld [vmem:[%s3] sm:$0xff]
      %v744 = vld [vmem:[%s4] sm:$0x1]
      %746 = vset.pattern.permute.xlu0 0
      %747 = vperm.xlu0 %746, %v743
      %v748 = vpop.permute.xlu0 %747
      %v751 = vlaneseq
      %v752 = vshrl.u32 %v751, 7
      %v753 = vsub.s32 0, %v752
      %v754 = vrot.slane %v744, %v753
      %v756 = vadd.f32 %v748, %v754
      %v757 = vld [vmem:[#allocation2] sm:$0xff]
      %s758 = sld [smem:[#allocation3]]
      %v759 = vstv %s758
      %v760 = vmul.f32 %v757, %v759
      %v761 = vadd.f32 %v756, %v760
      %v762 = vmin.f32 %v761, 0.0
      %v763 = vmul.f32 %v762, 1.442695
      %v764 = vpow.pop %v763
      %765 = vst [vmem:[#allocation4] sm:$0xff] %v764
    $region29: #{tpu_custom_call.1} parent=1 // pred_fallthru
      _
    // Predicated region
    $region30: #{tpu_custom_call.1} parent=1 // pred_check
      _
    $region31: #{tpu_custom_call.1} parent=1 // pred_check_branch
      %767 = sbr.rel (0) target = $region33
    $region32: #{tpu_custom_call.1} parent=1 // pred_region
      %s769 = ssub.s32 128, 128
      %770 = vsyncadd [#allocation5], %s769
      %s772 = sshll.u32 [#allocation4], 4
      %s773 = int_to_ptr.vmem [resolvable:$true] %s772
      %775 = dma.vmem_to_hbm [thread:$0]  %s773, 128, %s5, [#allocation5]
    $region33: #{tpu_custom_call.1} parent=1 // pred_fallthru
      _
    // Predicated region
    $region34: #{tpu_custom_call.1} parent=1 // pred_check
      _
    $region35: #{tpu_custom_call.1} parent=1 // pred_check_branch
      %777 = sbr.rel (0) target = $region37
    $region36: #{tpu_custom_call.1} parent=1 // pred_region
      %778 = dma.done [#allocation5], 128
    $region37: #{tpu_custom_call.1} parent=1 // pred_fallthru
      _
    %779 = vsyncpa [#allocation5], 1

</llo_original>
